<compile_context>
chip_gen: v7x
topology: tpu7x:2x2x1
jax: 0.10.0
libtpu: 0.0.40
codegen_flags: <defaults>
</compile_context>

<pallas_src>
import jax
import jax.numpy as jnp
from jax.experimental import pallas as pl
from jax.experimental.pallas import tpu as pltpu


# ---------------------------------------------------------------------------
# Natural cubic spline coefficients (mirrors torchcubicspline's
# natural_cubic_spline_coeffs).  K is tiny (lengths+2 = 4), so this is glue.
# ---------------------------------------------------------------------------
def _tridiagonal_solve(rhs, a_upper, a_diag, a_lower):
    # Thomas algorithm, unrolled (K is a small static number of knots).
    k = rhs.shape[0]
    new_b = [None] * k
    new_d = [None] * k
    new_b[0] = rhs[0]
    new_d[0] = a_diag[0]
    for i in range(1, k):
        w = a_lower[i - 1] / new_d[i - 1]
        new_d[i] = a_diag[i] - w * a_upper[i - 1]
        new_b[i] = rhs[i] - w * new_b[i - 1]
    x = [None] * k
    x[-1] = new_b[-1] / new_d[-1]
    for i in range(k - 2, -1, -1):
        x[i] = (new_b[i] - a_upper[i] * x[i + 1]) / new_d[i]
    return jnp.stack(x, axis=0)


def natural_cubic_spline_coeffs(t_knots, x):
    # t_knots: (K,), x: (K, D)   ->  a, b, two_c, three_d, each (K-1, D)
    length = x.shape[0]
    time_diffs = t_knots[1:] - t_knots[:-1]                 # (K-1,)
    tdr = 1.0 / time_diffs
    tdr2 = tdr * tdr
    three_path_diffs = 3.0 * (x[1:] - x[:-1])               # (K-1, D)
    six_path_diffs = 2.0 * three_path_diffs
    path_diffs_scaled = three_path_diffs * tdr2[:, None]

    sys_diag = jnp.zeros((length,), x.dtype)
    sys_diag = sys_diag.at[:-1].set(tdr)
    sys_diag = sys_diag.at[1:].add(tdr)
    sys_diag = sys_diag * 2.0

    sys_rhs = jnp.zeros_like(x)
    sys_rhs = sys_rhs.at[:-1].set(path_diffs_scaled)
    sys_rhs = sys_rhs.at[1:].add(path_diffs_scaled)

    knot_derivs = _tridiagonal_solve(sys_rhs, tdr, sys_diag, tdr)   # (K, D)

    a = x[:-1]
    b = knot_derivs[:-1]
    two_c = (six_path_diffs * tdr[:, None]
             - 4.0 * knot_derivs[:-1]
             - 2.0 * knot_derivs[1:]) * tdr[:, None]
    three_d = (-six_path_diffs * tdr[:, None]
               + 3.0 * (knot_derivs[:-1] + knot_derivs[1:])) * tdr[:, None]
    return a, b, two_c, three_d


# ---------------------------------------------------------------------------
# Pallas kernel (transposed, lane-dense layout).
#   t_ref     : (1, TN)        f32  query times (samples along lanes)
#   coeff_ref : (D, 4*n_int)   f32  packed columns [a | b | 0.5*two_c | three_d/3]
#   o_ref     : (D, TN)        f32  evaluated curve points (transposed)
# ---------------------------------------------------------------------------
def _spline_eval_kernel(t_ref, coeff_ref, o_ref):
    n_int = coeff_ref.shape[1] // 4              # number of spline intervals

    t = t_ref[...]                               # (1, TN) lane-dense

    # Uniform knots at j/(K-1):  torch.bucketize(t, knots) - 1, clamped,
    # becomes pure arithmetic (no cross-lane compares/reductions).
    n_int_f = jnp.float32(n_int)
    inv_dt = jnp.float32(1.0 / n_int)
    idx = jnp.clip(jnp.ceil(t * n_int_f) - 1.0, 0.0, n_int_f - 1.0)  # (1, TN) exact ints
    frac = t - idx * inv_dt                                           # (1, TN)

    def col(j):
        # Static ref slice -> (D, 1) column, broadcast over lanes in the FMA.
        return coeff_ref[:, j:j + 1]

    # VPU one-hot select of per-interval coefficients.  n_int is tiny, so a
    # fully unrolled chain of FMAs; w_k broadcasts along sublanes, the
    # coefficient column broadcasts along lanes.
    # NOTE: float equality is safe only because idx is an exact small integer
    # produced by ceil/clip above; keep that invariant.
    w0 = (idx == jnp.float32(0)).astype(jnp.float32)                  # (1, TN)
    A = w0 * col(0)
    B = w0 * col(n_int)
    Ch = w0 * col(2 * n_int)                      # already 0.5 * two_c
    Dt = w0 * col(3 * n_int)                      # already three_d / 3
    for k in range(1, n_int):
        wk = (idx == jnp.float32(k)).astype(jnp.float32)
        A = A + wk * col(k)
        B = B + wk * col(n_int + k)
        Ch = Ch + wk * col(2 * n_int + k)
        Dt = Dt + wk * col(3 * n_int + k)

    # Horner, exactly as NaturalCubicSpline.evaluate:
    #   a + frac*(b + frac*(0.5*two_c + frac*(three_d/3)))
    out = A + frac * (B + frac * (Ch + frac * Dt))                    # (D, TN)
    o_ref[...] = out.astype(o_ref.dtype)


def _num_tensorcores():
    # v7x has 2 TensorCores per chip; v5e/v6e have 1.  Gate grid splitting.
    try:
        kind = jax.devices()[0].device_kind.lower()
        if "v7" in kind:
            return 2
    except Exception:
        pass
    return 1


def spline_evaluate(t, a, b, two_c, three_d, *, tile_n=8192):
    # t: (N,), coeffs: (n_int, D)  ->  (N, D).  Knots assumed uniform on [0,1].
    n = t.shape[0]
    n_int, d = a.shape

    # Lane-dense tiling over the sample axis (multiples of 128 lanes).
    n128 = ((n + 127) // 128) * 128
    tile_big = max(128, ((min(tile_n, n128) + 127) // 128) * 128)
    steps = -(-n128 // tile_big)                           # ceil
    if _num_tensorcores() >= 2 and n128 >= 256:
        steps = max(steps, 2)                              # keep both TCs busy
    tile = ((-(-n128 // steps) + 127) // 128) * 128        # minimize padding
    n_pad = steps * tile
    grid = (steps,)

    # Query times as a lane-dense (1, n_pad) row.
    t2 = jnp.zeros((1, n_pad), jnp.float32).at[0, :n].set(t.astype(jnp.float32))

    # Pack the four coefficient arrays into a single (D, 4*n_int) constant,
    # transposed so columns broadcast over the lane (sample) axis, with the
    # Horner constants pre-folded (multiplies only inside the kernel).
    coeff_t = jnp.concatenate(
        [a.T, b.T, 0.5 * two_c.T, three_d.T * (1.0 / 3.0)], axis=1
    ).astype(jnp.float32)                                  # (D, 4*n_int)

    cost = pl.CostEstimate(
        flops=int(35 * n_pad * d),
        transcendentals=0,
        bytes_accessed=int(4 * n_pad * d + 4 * n_pad + 4 * coeff_t.size),
    )

    out_t = pl.pallas_call(
        _spline_eval_kernel,
        out_shape=jax.ShapeDtypeStruct((d, n_pad), jnp.float32),
        grid_spec=pltpu.PrefetchScalarGridSpec(
            num_scalar_prefetch=0,
            grid=grid,
            in_specs=[
                pl.BlockSpec((1, tile), lambda i: (0, i)),
                pl.BlockSpec((d, 4 * n_int), lambda i: (0, 0)),
            ],
            out_specs=pl.BlockSpec((d, tile), lambda i: (0, i)),
        ),
        compiler_params=pltpu.CompilerParams(
            dimension_semantics=("parallel",)),
        cost_estimate=cost,
    )(t2, coeff_t)

    # TODO(synk): optional bf16 output (cast at the final store) if the
    # consumer tolerates it; keeps f32 here for exact parity with the module.
    return out_t[:, :n].T                                  # (N, D)


# ---------------------------------------------------------------------------
# Module equivalent
# ---------------------------------------------------------------------------
class CubicSplineCurve:
    def __init__(self, z_i, z_f, lengths=2):
        # z_i, z_f: (D,)   (matches torch: unsqueeze(0) -> (1, D) rows)
        self.z_i = z_i[None, :].astype(jnp.float32)
        self.z_f = z_f[None, :].astype(jnp.float32)
        self.lengths = lengths
        # Parameter init exactly as in __init__ (randn_like * 0.0 == 0)
        self.z = jnp.concatenate(
            [self.z_i + (self.z_f - self.z_i) * tt / (lengths + 1)
             for tt in range(1, lengths + 1)], axis=0)                  # (lengths, D)
        self.t_linspace = jnp.linspace(0.0, 1.0, lengths + 2).astype(jnp.float32)

    def append(self):
        return jnp.concatenate([self.z_i, self.z, self.z_f], axis=0)    # (lengths+2, D)

    def forward(self, t):
        a, b, two_c, three_d = natural_cubic_spline_coeffs(self.t_linspace, self.append())
        # t_linspace is always uniform on [0,1] for this module; the kernel
        # exploits that (no knot-time input).
        return spline_evaluate(t, a, b, two_c, three_d)


# Pure-JAX reference for verification (faithful to torchcubicspline.evaluate)
def _reference_eval(t, knot_times, a, b, two_c, three_d):
    n_int = a.shape[0]
    idx = jnp.clip(jnp.searchsorted(knot_times, t, side="left") - 1, 0, n_int - 1)
    frac = (t - knot_times[idx])[:, None]
    inner = 0.5 * two_c[idx] + three_d[idx] * frac / 3.0
    inner = b[idx] + inner * frac
    return a[idx] + inner * frac


if __name__ == "__main__":
    key = jax.random.PRNGKey(0)
    D = 32        # latent dimension of z_i / z_f
    lengths = 2   # interior control points (module default)

    k1, k2, k3, k4 = jax.random.split(key, 4)
    z_i = jax.random.normal(k1, (D,), jnp.float32)
    z_f = jax.random.normal(k2, (D,), jnp.float32)

    curve = CubicSplineCurve(z_i, z_f, lengths=lengths)
    a, b, c2, c3 = natural_cubic_spline_coeffs(curve.t_linspace, curve.append())

    # Small case (N = 8): single grid step, heavy padding path.
    t_small = jax.random.uniform(k3, (8,), jnp.float32)
    out_small = jax.block_until_ready(curve.forward(t_small))
    assert out_small.shape == (8, D)
    ref_small = _reference_eval(t_small, curve.t_linspace, a, b, c2, c3)
    if not jnp.allclose(out_small, ref_small, atol=1e-5, rtol=1e-5):
        raise SystemExit("mismatch between Pallas kernel and reference (N=8)")

    # Larger case (N = 300): exercises padding + (on v7x) a 2-step parallel grid.
    t_big = jax.random.uniform(k4, (300,), jnp.float32)
    out_big = jax.block_until_ready(curve.forward(t_big))
    assert out_big.shape == (300, D)
    ref_big = _reference_eval(t_big, curve.t_linspace, a, b, c2, c3)
    if not jnp.allclose(out_big, ref_big, atol=1e-5, rtol=1e-5):
        raise SystemExit("mismatch between Pallas kernel and reference (N=300)")

    print("KERNEL_OK")
</pallas_src>

<mosaic_0001>
module attributes {stable_mosaic.version = 11 : i64} {
  func.func @_spline_eval_kernel(%arg0: i32, %arg1: memref<1x128xf32, #tpu.memory_space<vmem>>, %arg2: memref<32x12xf32, #tpu.memory_space<vmem>>, %arg3: memref<32x128xf32, #tpu.memory_space<vmem>>) attributes {dimension_semantics = [#tpu.dimension_semantics<parallel>], iteration_bounds = array<i64: 1>, scalar_prefetch = 0 : i64, scratch_operands = 0 : i64, tpu.core_type = #tpu.core_type<tc>, window_params = [{transform_indices = @transform_0, window_bounds = array<i64: 1, 128>}, {pipeline_mode = #tpu.pipeline_mode<synchronous>, transform_indices = @transform_1, window_bounds = array<i64: 32, 12>}, {transform_indices = @transform_2, window_bounds = array<i64: 32, 128>}]} {
    %c0 = arith.constant 0 : index
    %c0_0 = arith.constant 0 : index
    %0 = vector.load %arg1[%c0, %c0_0] : memref<1x128xf32, #tpu.memory_space<vmem>>, vector<1x128xf32>
    %cst = arith.constant 3.000000e+00 : f32
    %1 = vector.broadcast %cst : f32 to vector<1x128xf32>
    %2 = arith.mulf %0, %1 : vector<1x128xf32>
    %3 = math.ceil %2 : vector<1x128xf32>
    %cst_1 = arith.constant 1.000000e+00 : f32
    %4 = vector.broadcast %cst_1 : f32 to vector<1x128xf32>
    %5 = arith.subf %3, %4 : vector<1x128xf32>
    %cst_2 = arith.constant 3.000000e+00 : f32
    %cst_3 = arith.constant 1.000000e+00 : f32
    %6 = arith.subf %cst_2, %cst_3 : f32
    %cst_4 = arith.constant 0.000000e+00 : f32
    %7 = vector.broadcast %cst_4 : f32 to vector<1x128xf32>
    %8 = arith.maximumf %7, %5 : vector<1x128xf32>
    %9 = vector.broadcast %6 : f32 to vector<1x128xf32>
    %10 = arith.minimumf %9, %8 : vector<1x128xf32>
    %cst_5 = arith.constant 0.333333343 : f32
    %11 = vector.broadcast %cst_5 : f32 to vector<1x128xf32>
    %12 = arith.mulf %10, %11 : vector<1x128xf32>
    %13 = arith.subf %0, %12 : vector<1x128xf32>
    %cst_6 = arith.constant 0.000000e+00 : f32
    %14 = vector.broadcast %cst_6 : f32 to vector<1x128xf32>
    %15 = arith.cmpf oeq, %10, %14 : vector<1x128xf32>
    %16 = arith.extui %15 : vector<1x128xi1> to vector<1x128xi32>
    %17 = arith.sitofp %16 : vector<1x128xi32> to vector<1x128xf32>
    %c0_7 = arith.constant 0 : index
    %c0_8 = arith.constant 0 : index
    %18 = vector.load %arg2[%c0_7, %c0_8] : memref<32x12xf32, #tpu.memory_space<vmem>>, vector<32x1xf32>
    %19 = vector.broadcast %17 : vector<1x128xf32> to vector<32x128xf32>
    %20 = vector.broadcast %18 : vector<32x1xf32> to vector<32x128xf32>
    %21 = arith.mulf %19, %20 : vector<32x128xf32>
    %c0_9 = arith.constant 0 : index
    %c3 = arith.constant 3 : index
    %22 = vector.load %arg2[%c0_9, %c3] : memref<32x12xf32, #tpu.memory_space<vmem>>, vector<32x1xf32>
    %23 = vector.broadcast %17 : vector<1x128xf32> to vector<32x128xf32>
    %24 = vector.broadcast %22 : vector<32x1xf32> to vector<32x128xf32>
    %25 = arith.mulf %23, %24 : vector<32x128xf32>
    %c0_10 = arith.constant 0 : index
    %c6 = arith.constant 6 : index
    %26 = vector.load %arg2[%c0_10, %c6] : memref<32x12xf32, #tpu.memory_space<vmem>>, vector<32x1xf32>
    %27 = vector.broadcast %17 : vector<1x128xf32> to vector<32x128xf32>
    %28 = vector.broadcast %26 : vector<32x1xf32> to vector<32x128xf32>
    %29 = arith.mulf %27, %28 : vector<32x128xf32>
    %c0_11 = arith.constant 0 : index
    %c9 = arith.constant 9 : index
    %30 = vector.load %arg2[%c0_11, %c9] : memref<32x12xf32, #tpu.memory_space<vmem>>, vector<32x1xf32>
    %31 = vector.broadcast %17 : vector<1x128xf32> to vector<32x128xf32>
    %32 = vector.broadcast %30 : vector<32x1xf32> to vector<32x128xf32>
    %33 = arith.mulf %31, %32 : vector<32x128xf32>
    %cst_12 = arith.constant 1.000000e+00 : f32
    %34 = vector.broadcast %cst_12 : f32 to vector<1x128xf32>
    %35 = arith.cmpf oeq, %10, %34 : vector<1x128xf32>
    %36 = arith.extui %35 : vector<1x128xi1> to vector<1x128xi32>
    %37 = arith.sitofp %36 : vector<1x128xi32> to vector<1x128xf32>
    %c0_13 = arith.constant 0 : index
    %c1 = arith.constant 1 : index
    %38 = vector.load %arg2[%c0_13, %c1] : memref<32x12xf32, #tpu.memory_space<vmem>>, vector<32x1xf32>
    %39 = vector.broadcast %37 : vector<1x128xf32> to vector<32x128xf32>
    %40 = vector.broadcast %38 : vector<32x1xf32> to vector<32x128xf32>
    %41 = arith.mulf %39, %40 : vector<32x128xf32>
    %42 = arith.addf %21, %41 : vector<32x128xf32>
    %c0_14 = arith.constant 0 : index
    %c4 = arith.constant 4 : index
    %43 = vector.load %arg2[%c0_14, %c4] : memref<32x12xf32, #tpu.memory_space<vmem>>, vector<32x1xf32>
    %44 = vector.broadcast %37 : vector<1x128xf32> to vector<32x128xf32>
    %45 = vector.broadcast %43 : vector<32x1xf32> to vector<32x128xf32>
    %46 = arith.mulf %44, %45 : vector<32x128xf32>
    %47 = arith.addf %25, %46 : vector<32x128xf32>
    %c0_15 = arith.constant 0 : index
    %c7 = arith.constant 7 : index
    %48 = vector.load %arg2[%c0_15, %c7] : memref<32x12xf32, #tpu.memory_space<vmem>>, vector<32x1xf32>
    %49 = vector.broadcast %37 : vector<1x128xf32> to vector<32x128xf32>
    %50 = vector.broadcast %48 : vector<32x1xf32> to vector<32x128xf32>
    %51 = arith.mulf %49, %50 : vector<32x128xf32>
    %52 = arith.addf %29, %51 : vector<32x128xf32>
    %c0_16 = arith.constant 0 : index
    %c10 = arith.constant 10 : index
    %53 = vector.load %arg2[%c0_16, %c10] : memref<32x12xf32, #tpu.memory_space<vmem>>, vector<32x1xf32>
    %54 = vector.broadcast %37 : vector<1x128xf32> to vector<32x128xf32>
    %55 = vector.broadcast %53 : vector<32x1xf32> to vector<32x128xf32>
    %56 = arith.mulf %54, %55 : vector<32x128xf32>
    %57 = arith.addf %33, %56 : vector<32x128xf32>
    %cst_17 = arith.constant 2.000000e+00 : f32
    %58 = vector.broadcast %cst_17 : f32 to vector<1x128xf32>
    %59 = arith.cmpf oeq, %10, %58 : vector<1x128xf32>
    %60 = arith.extui %59 : vector<1x128xi1> to vector<1x128xi32>
    %61 = arith.sitofp %60 : vector<1x128xi32> to vector<1x128xf32>
    %c0_18 = arith.constant 0 : index
    %c2 = arith.constant 2 : index
    %62 = vector.load %arg2[%c0_18, %c2] : memref<32x12xf32, #tpu.memory_space<vmem>>, vector<32x1xf32>
    %63 = vector.broadcast %61 : vector<1x128xf32> to vector<32x128xf32>
    %64 = vector.broadcast %62 : vector<32x1xf32> to vector<32x128xf32>
    %65 = arith.mulf %63, %64 : vector<32x128xf32>
    %66 = arith.addf %42, %65 : vector<32x128xf32>
    %c0_19 = arith.constant 0 : index
    %c5 = arith.constant 5 : index
    %67 = vector.load %arg2[%c0_19, %c5] : memref<32x12xf32, #tpu.memory_space<vmem>>, vector<32x1xf32>
    %68 = vector.broadcast %61 : vector<1x128xf32> to vector<32x128xf32>
    %69 = vector.broadcast %67 : vector<32x1xf32> to vector<32x128xf32>
    %70 = arith.mulf %68, %69 : vector<32x128xf32>
    %71 = arith.addf %47, %70 : vector<32x128xf32>
    %c0_20 = arith.constant 0 : index
    %c8 = arith.constant 8 : index
    %72 = vector.load %arg2[%c0_20, %c8] : memref<32x12xf32, #tpu.memory_space<vmem>>, vector<32x1xf32>
    %73 = vector.broadcast %61 : vector<1x128xf32> to vector<32x128xf32>
    %74 = vector.broadcast %72 : vector<32x1xf32> to vector<32x128xf32>
    %75 = arith.mulf %73, %74 : vector<32x128xf32>
    %76 = arith.addf %52, %75 : vector<32x128xf32>
    %c0_21 = arith.constant 0 : index
    %c11 = arith.constant 11 : index
    %77 = vector.load %arg2[%c0_21, %c11] : memref<32x12xf32, #tpu.memory_space<vmem>>, vector<32x1xf32>
    %78 = vector.broadcast %61 : vector<1x128xf32> to vector<32x128xf32>
    %79 = vector.broadcast %77 : vector<32x1xf32> to vector<32x128xf32>
    %80 = arith.mulf %78, %79 : vector<32x128xf32>
    %81 = arith.addf %57, %80 : vector<32x128xf32>
    %82 = vector.broadcast %13 : vector<1x128xf32> to vector<32x128xf32>
    %83 = arith.mulf %82, %81 : vector<32x128xf32>
    %84 = arith.addf %76, %83 : vector<32x128xf32>
    %85 = vector.broadcast %13 : vector<1x128xf32> to vector<32x128xf32>
    %86 = arith.mulf %85, %84 : vector<32x128xf32>
    %87 = arith.addf %71, %86 : vector<32x128xf32>
    %88 = vector.broadcast %13 : vector<1x128xf32> to vector<32x128xf32>
    %89 = arith.mulf %88, %87 : vector<32x128xf32>
    %90 = arith.addf %66, %89 : vector<32x128xf32>
    %c0_22 = arith.constant 0 : index
    %c0_23 = arith.constant 0 : index
    %91 = vector.load %arg3[%c0_22, %c0_23] : memref<32x128xf32, #tpu.memory_space<vmem>>, vector<32x128xf32>
    tpu.vector_store %arg3[%c0_22, %c0_23], %90 {strides = array<i32>} : memref<32x128xf32, #tpu.memory_space<vmem>>, vector<32x128xf32>,
    return
  }
  func.func @transform_0(%arg0: i32) -> (i32, i32) {
    %c0_i32 = arith.constant 0 : i32
    %c0_i32_0 = arith.constant 0 : i32
    return %c0_i32, %arg0 : i32, i32
  }
  func.func @transform_1(%arg0: i32) -> (i32, i32) {
    %c0_i32 = arith.constant 0 : i32
    %c0_i32_0 = arith.constant 0 : i32
    %c0_i32_1 = arith.constant 0 : i32
    return %c0_i32, %c0_i32_0 : i32, i32
  }
  func.func @transform_2(%arg0: i32) -> (i32, i32) {
    %c0_i32 = arith.constant 0 : i32
    %c0_i32_0 = arith.constant 0 : i32
    return %c0_i32, %arg0 : i32, i32
  }
}

</mosaic_0001>

<llo_original>
// kernel: tpu_custom_call.1
$region0: #{tpu_custom_call.1}
  #allocation0 [shape = 'u32[]', space=smem, size = 0x4, offset = 0x4, fixed_abs, tag = 'smem constant byte address 0x4 - core index']
  #allocation1 [shape = 'u32[144,128]{1,0:T(1,128)}', space=vmem, size = 0x12000, scoped, tag = 'internal scratch']
  %s0 = inlined_call_operand.vmem [shape: f32[1,128], index: 0, kind: input, shape index: {}]
  %s1 = inlined_call_operand.vmem [shape: f32[32,12], index: 1, kind: input, shape index: {}]
  %s2 = inlined_call_operand.hbm [shape: f32[32,128], index: 2, kind: output, shape index: {}]
  %s3 = sld [smem:[#allocation0]]
  $region18: #{tpu_custom_call.1} parent=0
    _
  %s5 = ssub.s32 1, %s3
  %s6 = scalar_select 0, %s5, %s3
  $region1: #{tpu_custom_call.1} parent=0
    #allocation2 [shape = 'u8[16384]{0}', space=vmem, size = 0x4000, scoped, tag = 'output window, operand 0, single buffered']
    #allocation3 [shape = 's32[1]{0}', space=sflag, size = 0x4, scoped, tag = 'scoped memory for tpu_custom_call.1']
    %7 = vsyncpa [#allocation3], 0
    // Predicated region
    $region2: #{tpu_custom_call.1} parent=1 // pred_check
      _
    $region3: #{tpu_custom_call.1} parent=1 // pred_check_branch
      %9 = sbr.rel (0) target = $region5
    $region4: #{tpu_custom_call.1} parent=1 // pred_region
      _
    $region5: #{tpu_custom_call.1} parent=1 // pred_fallthru
      _
    // Predicated region
    $region6: #{tpu_custom_call.1} parent=1 // pred_check
      _
    $region7: #{tpu_custom_call.1} parent=1 // pred_check_branch
      %11 = sbr.rel (0) target = $region9
    $region8: #{tpu_custom_call.1} parent=1 // pred_region
      _
    $region9: #{tpu_custom_call.1} parent=1 // pred_fallthru
      _
    %v12 = vld [vmem:[%s0] sm:$0x1]
    %v13 = vmul.f32 %v12, 3.0
    %v14 = vceil.f32 %v13
    %v15 = vsub.f32 %v14, 1.0
    %v16 = vmax.f32 %v15, 0.0
    %v17 = vmin.f32 %v16, 2.0
    %v18 = vmul.f32 %v17, 0.33333334
    %v19 = vsub.f32 %v12, %v18
    %vm20 = vcmp.eq.f32.partialorder %v17, 0.0
    %v21 = vsel %vm20, 1, 0
    %v22 = vcvt.s32.f32 %v21
    %v23 = vld [vmem:[%s1] sm:$0xff]
    %v24 = vld [vmem:[%s1 + $0x8] sm:$0xff]
    %v25 = vld [vmem:[%s1 + $0x10] sm:$0xff]
    %v26 = vld [vmem:[%s1 + $0x18] sm:$0xff]
    %v28 = vlaneseq
    %v29 = vshrl.u32 %v28, 7
    %v30 = vsub.s32 0, %v29
    %v31 = vrot.slane %v22, %v30
    %34 = vset.pattern.permute.xlu0 0
    %35 = vperm.xlu0 %34, %v23
    %v36 = vpop.permute.xlu0 %35
    %39 = vset.pattern.permute.xlu0 0
    %40 = vperm.xlu0 %39, %v24
    %v41 = vpop.permute.xlu0 %40
    %44 = vset.pattern.permute.xlu0 0
    %45 = vperm.xlu0 %44, %v25
    %v46 = vpop.permute.xlu0 %45
    %49 = vset.pattern.permute.xlu0 0
    %50 = vperm.xlu0 %49, %v26
    %v51 = vpop.permute.xlu0 %50
    %v53 = vmul.f32 %v31, %v36
    %v54 = vmul.f32 %v31, %v41
    %v55 = vmul.f32 %v31, %v46
    %v56 = vmul.f32 %v31, %v51
    %57 = vset.pattern.permute.xlu0 3
    %58 = vperm.xlu0 %57, %v23
    %v59 = vpop.permute.xlu0 %58
    %61 = vset.pattern.permute.xlu0 3
    %62 = vperm.xlu0 %61, %v24
    %v63 = vpop.permute.xlu0 %62
    %65 = vset.pattern.permute.xlu0 3
    %66 = vperm.xlu0 %65, %v25
    %v67 = vpop.permute.xlu0 %66
    %69 = vset.pattern.permute.xlu0 3
    %70 = vperm.xlu0 %69, %v26
    %v71 = vpop.permute.xlu0 %70
    %v73 = vmul.f32 %v31, %v59
    %v74 = vmul.f32 %v31, %v63
    %v75 = vmul.f32 %v31, %v67
    %v76 = vmul.f32 %v31, %v71
    %77 = vset.pattern.permute.xlu0 6
    %78 = vperm.xlu0 %77, %v23
    %v79 = vpop.permute.xlu0 %78
    %81 = vset.pattern.permute.xlu0 6
    %82 = vperm.xlu0 %81, %v24
    %v83 = vpop.permute.xlu0 %82
    %85 = vset.pattern.permute.xlu0 6
    %86 = vperm.xlu0 %85, %v25
    %v87 = vpop.permute.xlu0 %86
    %89 = vset.pattern.permute.xlu0 6
    %90 = vperm.xlu0 %89, %v26
    %v91 = vpop.permute.xlu0 %90
    %v93 = vmul.f32 %v31, %v79
    %v94 = vmul.f32 %v31, %v83
    %v95 = vmul.f32 %v31, %v87
    %v96 = vmul.f32 %v31, %v91
    %97 = vset.pattern.permute.xlu0 9
    %98 = vperm.xlu0 %97, %v23
    %v99 = vpop.permute.xlu0 %98
    %101 = vset.pattern.permute.xlu0 9
    %102 = vperm.xlu0 %101, %v24
    %v103 = vpop.permute.xlu0 %102
    %105 = vset.pattern.permute.xlu0 9
    %106 = vperm.xlu0 %105, %v25
    %v107 = vpop.permute.xlu0 %106
    %109 = vset.pattern.permute.xlu0 9
    %110 = vperm.xlu0 %109, %v26
    %v111 = vpop.permute.xlu0 %110
    %v113 = vmul.f32 %v31, %v99
    %v114 = vmul.f32 %v31, %v103
    %v115 = vmul.f32 %v31, %v107
    %v116 = vmul.f32 %v31, %v111
    %vm117 = vcmp.eq.f32.partialorder %v17, 1.0
    %v118 = vsel %vm117, 1, 0
    %v119 = vcvt.s32.f32 %v118
    %v121 = vlaneseq
    %v122 = vshrl.u32 %v121, 7
    %v123 = vsub.s32 0, %v122
    %v124 = vrot.slane %v119, %v123
    %126 = vset.pattern.permute.xlu0 1
    %127 = vperm.xlu0 %126, %v23
    %v128 = vpop.permute.xlu0 %127
    %130 = vset.pattern.permute.xlu0 1
    %131 = vperm.xlu0 %130, %v24
    %v132 = vpop.permute.xlu0 %131
    %134 = vset.pattern.permute.xlu0 1
    %135 = vperm.xlu0 %134, %v25
    %v136 = vpop.permute.xlu0 %135
    %138 = vset.pattern.permute.xlu0 1
    %139 = vperm.xlu0 %138, %v26
    %v140 = vpop.permute.xlu0 %139
    %v142 = vmul.f32 %v124, %v128
    %v143 = vmul.f32 %v124, %v132
    %v144 = vmul.f32 %v124, %v136
    %v145 = vmul.f32 %v124, %v140
    %v146 = vadd.f32 %v53, %v142
    %v147 = vadd.f32 %v54, %v143
    %v148 = vadd.f32 %v55, %v144
    %v149 = vadd.f32 %v56, %v145
    %150 = vset.pattern.permute.xlu0 4
    %151 = vperm.xlu0 %150, %v23
    %v152 = vpop.permute.xlu0 %151
    %154 = vset.pattern.permute.xlu0 4
    %155 = vperm.xlu0 %154, %v24
    %v156 = vpop.permute.xlu0 %155
    %158 = vset.pattern.permute.xlu0 4
    %159 = vperm.xlu0 %158, %v25
    %v160 = vpop.permute.xlu0 %159
    %162 = vset.pattern.permute.xlu0 4
    %163 = vperm.xlu0 %162, %v26
    %v164 = vpop.permute.xlu0 %163
    %v166 = vmul.f32 %v124, %v152
    %v167 = vmul.f32 %v124, %v156
    %v168 = vmul.f32 %v124, %v160
    %v169 = vmul.f32 %v124, %v164
    %v170 = vadd.f32 %v73, %v166
    %v171 = vadd.f32 %v74, %v167
    %v172 = vadd.f32 %v75, %v168
    %v173 = vadd.f32 %v76, %v169
    %174 = vset.pattern.permute.xlu0 7
    %175 = vperm.xlu0 %174, %v23
    %v176 = vpop.permute.xlu0 %175
    %178 = vset.pattern.permute.xlu0 7
    %179 = vperm.xlu0 %178, %v24
    %v180 = vpop.permute.xlu0 %179
    %182 = vset.pattern.permute.xlu0 7
    %183 = vperm.xlu0 %182, %v25
    %v184 = vpop.permute.xlu0 %183
    %186 = vset.pattern.permute.xlu0 7
    %187 = vperm.xlu0 %186, %v26
    %v188 = vpop.permute.xlu0 %187
    %v190 = vmul.f32 %v124, %v176
    %v191 = vmul.f32 %v124, %v180
    %v192 = vmul.f32 %v124, %v184
    %v193 = vmul.f32 %v124, %v188
    %v194 = vadd.f32 %v93, %v190
    %v195 = vadd.f32 %v94, %v191
    %v196 = vadd.f32 %v95, %v192
    %v197 = vadd.f32 %v96, %v193
    %198 = vset.pattern.permute.xlu0 10
    %199 = vperm.xlu0 %198, %v23
    %v200 = vpop.permute.xlu0 %199
    %202 = vset.pattern.permute.xlu0 10
    %203 = vperm.xlu0 %202, %v24
    %v204 = vpop.permute.xlu0 %203
    %206 = vset.pattern.permute.xlu0 10
    %207 = vperm.xlu0 %206, %v25
    %v208 = vpop.permute.xlu0 %207
    %210 = vset.pattern.permute.xlu0 10
    %211 = vperm.xlu0 %210, %v26
    %v212 = vpop.permute.xlu0 %211
    %v214 = vmul.f32 %v124, %v200
    %v215 = vmul.f32 %v124, %v204
    %v216 = vmul.f32 %v124, %v208
    %v217 = vmul.f32 %v124, %v212
    %v218 = vadd.f32 %v113, %v214
    %v219 = vadd.f32 %v114, %v215
    %v220 = vadd.f32 %v115, %v216
    %v221 = vadd.f32 %v116, %v217
    %vm222 = vcmp.eq.f32.partialorder %v17, 2.0
    %v223 = vsel %vm222, 1, 0
    %v224 = vcvt.s32.f32 %v223
    %v226 = vlaneseq
    %v227 = vshrl.u32 %v226, 7
    %v228 = vsub.s32 0, %v227
    %v229 = vrot.slane %v224, %v228
    %231 = vset.pattern.permute.xlu0 2
    %232 = vperm.xlu0 %231, %v23
    %v233 = vpop.permute.xlu0 %232
    %235 = vset.pattern.permute.xlu0 2
    %236 = vperm.xlu0 %235, %v24
    %v237 = vpop.permute.xlu0 %236
    %239 = vset.pattern.permute.xlu0 2
    %240 = vperm.xlu0 %239, %v25
    %v241 = vpop.permute.xlu0 %240
    %243 = vset.pattern.permute.xlu0 2
    %244 = vperm.xlu0 %243, %v26
    %v245 = vpop.permute.xlu0 %244
    %v247 = vmul.f32 %v229, %v233
    %v248 = vmul.f32 %v229, %v237
    %v249 = vmul.f32 %v229, %v241
    %v250 = vmul.f32 %v229, %v245
    %v251 = vadd.f32 %v146, %v247
    %v252 = vadd.f32 %v147, %v248
    %v253 = vadd.f32 %v148, %v249
    %v254 = vadd.f32 %v149, %v250
    %255 = vset.pattern.permute.xlu0 5
    %256 = vperm.xlu0 %255, %v23
    %v257 = vpop.permute.xlu0 %256
    %259 = vset.pattern.permute.xlu0 5
    %260 = vperm.xlu0 %259, %v24
    %v261 = vpop.permute.xlu0 %260
    %263 = vset.pattern.permute.xlu0 5
    %264 = vperm.xlu0 %263, %v25
    %v265 = vpop.permute.xlu0 %264
    %267 = vset.pattern.permute.xlu0 5
    %268 = vperm.xlu0 %267, %v26
    %v269 = vpop.permute.xlu0 %268
    %v271 = vmul.f32 %v229, %v257
    %v272 = vmul.f32 %v229, %v261
    %v273 = vmul.f32 %v229, %v265
    %v274 = vmul.f32 %v229, %v269
    %v275 = vadd.f32 %v170, %v271
    %v276 = vadd.f32 %v171, %v272
    %v277 = vadd.f32 %v172, %v273
    %v278 = vadd.f32 %v173, %v274
    %279 = vset.pattern.permute.xlu0 8
    %280 = vperm.xlu0 %279, %v23
    %v281 = vpop.permute.xlu0 %280
    %283 = vset.pattern.permute.xlu0 8
    %284 = vperm.xlu0 %283, %v24
    %v285 = vpop.permute.xlu0 %284
    %287 = vset.pattern.permute.xlu0 8
    %288 = vperm.xlu0 %287, %v25
    %v289 = vpop.permute.xlu0 %288
    %291 = vset.pattern.permute.xlu0 8
    %292 = vperm.xlu0 %291, %v26
    %v293 = vpop.permute.xlu0 %292
    %v295 = vmul.f32 %v229, %v281
    %v296 = vmul.f32 %v229, %v285
    %v297 = vmul.f32 %v229, %v289
    %v298 = vmul.f32 %v229, %v293
    %v299 = vadd.f32 %v194, %v295
    %v300 = vadd.f32 %v195, %v296
    %v301 = vadd.f32 %v196, %v297
    %v302 = vadd.f32 %v197, %v298
    %303 = vset.pattern.permute.xlu0 11
    %304 = vperm.xlu0 %303, %v23
    %v305 = vpop.permute.xlu0 %304
    %307 = vset.pattern.permute.xlu0 11
    %308 = vperm.xlu0 %307, %v24
    %v309 = vpop.permute.xlu0 %308
    %311 = vset.pattern.permute.xlu0 11
    %312 = vperm.xlu0 %311, %v25
    %v313 = vpop.permute.xlu0 %312
    %315 = vset.pattern.permute.xlu0 11
    %316 = vperm.xlu0 %315, %v26
    %v317 = vpop.permute.xlu0 %316
    %v319 = vmul.f32 %v229, %v305
    %v320 = vmul.f32 %v229, %v309
    %v321 = vmul.f32 %v229, %v313
    %v322 = vmul.f32 %v229, %v317
    %v323 = vadd.f32 %v218, %v319
    %v324 = vadd.f32 %v219, %v320
    %v325 = vadd.f32 %v220, %v321
    %v326 = vadd.f32 %v221, %v322
    %v328 = vlaneseq
    %v329 = vshrl.u32 %v328, 7
    %v330 = vsub.s32 0, %v329
    %v331 = vrot.slane %v19, %v330
    %v333 = vmul.f32 %v331, %v323
    %v334 = vmul.f32 %v331, %v324
    %v335 = vmul.f32 %v331, %v325
    %v336 = vmul.f32 %v331, %v326
    %v337 = vadd.f32 %v299, %v333
    %v338 = vadd.f32 %v300, %v334
    %v339 = vadd.f32 %v301, %v335
    %v340 = vadd.f32 %v302, %v336
    %v341 = vmul.f32 %v331, %v337
    %v342 = vmul.f32 %v331, %v338
    %v343 = vmul.f32 %v331, %v339
    %v344 = vmul.f32 %v331, %v340
    %v345 = vadd.f32 %v275, %v341
    %v346 = vadd.f32 %v276, %v342
    %v347 = vadd.f32 %v277, %v343
    %v348 = vadd.f32 %v278, %v344
    %v349 = vmul.f32 %v331, %v345
    %v350 = vmul.f32 %v331, %v346
    %v351 = vmul.f32 %v331, %v347
    %v352 = vmul.f32 %v331, %v348
    %v353 = vadd.f32 %v251, %v349
    %v354 = vadd.f32 %v252, %v350
    %v355 = vadd.f32 %v253, %v351
    %v356 = vadd.f32 %v254, %v352
    %357 = vst [vmem:[#allocation2] sm:$0xff] %v353
    %358 = vst [vmem:[#allocation2 + $0x8] sm:$0xff] %v354
    %359 = vst [vmem:[#allocation2 + $0x10] sm:$0xff] %v355
    %360 = vst [vmem:[#allocation2 + $0x18] sm:$0xff] %v356
    // Predicated region
    $region10: #{tpu_custom_call.1} parent=1 // pred_check
      _
    $region11: #{tpu_custom_call.1} parent=1 // pred_check_branch
      %362 = sbr.rel (0) target = $region13
    $region12: #{tpu_custom_call.1} parent=1 // pred_region
      %s364 = ssub.s32 512, 512
      %365 = vsyncadd [#allocation3], %s364
      %s366 = sshll.u32 [#allocation2], 4
      %s367 = int_to_ptr.vmem [resolvable:$true] %s366
      %372 = dma.vmem_to_hbm [thread:$0]  %s367, 512, %s2, [#allocation3], 128, 128, 8
    $region13: #{tpu_custom_call.1} parent=1 // pred_fallthru
      _
    // Predicated region
    $region14: #{tpu_custom_call.1} parent=1 // pred_check
      _
    $region15: #{tpu_custom_call.1} parent=1 // pred_check_branch
      %374 = sbr.rel (0) target = $region17
    $region16: #{tpu_custom_call.1} parent=1 // pred_region
      %375 = dma.done [#allocation3], 512
    $region17: #{tpu_custom_call.1} parent=1 // pred_fallthru
      _
    %376 = vsyncpa [#allocation3], 1

</llo_original>
